<compile_context>
chip_gen: v6e
topology: v6e:2x2x1
jax: 0.10.0
libtpu: 0.0.40
codegen_flags: <defaults>
</compile_context>

<pallas_src>
import functools

import jax
import jax.numpy as jnp
from jax.experimental import pallas as pl
from jax.experimental.pallas import tpu as pltpu


def _round_up(x: int, m: int) -> int:
    return ((x + m - 1) // m) * m


def _mat_embedding_kernel(x_ref, wt_ref, b_ref, o_ref):
    # x_ref:  (TM, K)  tile of flattened (prod(leading), d_input)
    # wt_ref: (K, N)   pre-transposed weight, resident across grid steps
    # b_ref:  (1, N)   bias row, resident across grid steps
    # o_ref:  (TM, N)
    acc = jnp.dot(x_ref[...], wt_ref[...], preferred_element_type=jnp.float32)
    acc = acc + b_ref[...].astype(jnp.float32)   # broadcast (1, N) over rows
    o_ref[...] = acc.astype(o_ref.dtype)
    # TODO(synk): training-mode dropout (dropout_p > 0) would build a keep-mask
    # here via pltpu.prng_seed / pltpu.prng_random_bits.


def _default_block_m() -> int:
    """Per-generation M-tile default (vmem_limit is always set explicitly)."""
    try:
        kind = jax.devices()[0].device_kind.lower()
    except Exception:
        return 1024
    if "v6" in kind or "v7" in kind or "trillium" in kind:
        return 2048          # fastest HBM -> biggest tiles to hide step cost
    return 1024              # v5e / unknown: step overhead already <10% here


def _choose_tm(m8: int, block_m: int) -> int:
    """Pick the M tile: as large as allowed, but keep >=2 grid steps for
    moderately large problems so v7x's two TensorCores both get work."""
    tm = min(block_m, m8)
    if m8 > 512 and pl.cdiv(m8, tm) < 2:
        tm = min(tm, max(256, _round_up(pl.cdiv(m8, 2), 256)))
    return tm


@functools.partial(jax.jit, static_argnames=("block_m", "out_dtype"))
def _mat_embedding_impl(x, weight_t, bias, block_m, out_dtype):
    d_input = x.shape[-1]
    lead = x.shape[:-1]
    d_output = weight_t.shape[1]

    x2d = x.reshape(-1, d_input)
    m = x2d.shape[0]
    m8 = _round_up(max(m, 1), 8)
    if m8 != m:
        # Rare path (M not a multiple of 8): pad rows so every block is a
        # plain (8,128)-aligned tile; sliced back off below.
        x2d = jnp.pad(x2d, ((0, m8 - m), (0, 0)))

    b2d = bias.reshape(1, d_output)
    tm = _choose_tm(m8, block_m)
    grid = (pl.cdiv(m8, tm),)

    in_isz = jnp.dtype(x2d.dtype).itemsize
    w_isz = jnp.dtype(weight_t.dtype).itemsize
    out_isz = jnp.dtype(out_dtype).itemsize

    # Explicit VMEM budget: double-buffered x / out tiles + resident
    # (double-buffered) weight and bias + headroom.  Auditable and identical
    # across v5e/v6e/v7x default scoped limits.
    vmem_bytes = (
        2 * tm * d_output * out_isz                                 # out tiles
        + 2 * tm * max(_round_up(d_input, 128), 128) * in_isz       # x tiles
        + 2 * _round_up(d_input, 8) * d_output * w_isz              # weight
        + 2 * 8 * d_output * w_isz                                  # bias
        + (4 << 20))                                                # headroom
    vmem_limit = int(min(max(vmem_bytes, 24 << 20), 64 << 20))

    cost = pl.CostEstimate(
        flops=2 * m8 * d_input * d_output,
        transcendentals=0,
        bytes_accessed=(m8 * d_input * in_isz
                        + d_input * d_output * w_isz
                        + d_output * w_isz
                        + m8 * d_output * out_isz))

    out2d = pl.pallas_call(
        _mat_embedding_kernel,
        out_shape=jax.ShapeDtypeStruct((m8, d_output), out_dtype),
        grid_spec=pl.GridSpec(
            grid=grid,
            in_specs=[
                pl.BlockSpec((tm, d_input), lambda i: (i, 0)),
                # Constant index_map -> weight/bias stay resident in VMEM.
                pl.BlockSpec((d_input, d_output), lambda i: (0, 0)),
                pl.BlockSpec((1, d_output), lambda i: (0, 0)),
            ],
            out_specs=pl.BlockSpec((tm, d_output), lambda i: (i, 0)),
        ),
        compiler_params=pltpu.CompilerParams(
            dimension_semantics=("parallel",),
            vmem_limit_bytes=vmem_limit),
        cost_estimate=cost,
    )(x2d, weight_t, b2d)

    if m8 != m:
        out2d = out2d[:m]
    return out2d.reshape(lead + (d_output,))


def mat_embedding(x, weight_t, bias, *, dropout_p: float = 0.0,
                  block_m=None, out_dtype=None):
    """MATEmbedding forward.

    x:        [..., d_input]
    weight_t: [d_input, d_output]  (nn.Linear weight pre-transposed once at init)
    bias:     [d_output]
    out_dtype: optional narrower output dtype (e.g. jnp.bfloat16) if the
               downstream encoder tolerates it; accumulation stays f32.
    """
    if dropout_p != 0.0:
        # Eval-mode semantics only; refuse to silently ignore training dropout.
        raise NotImplementedError(
            "mat_embedding: training-mode dropout (dropout_p > 0) not implemented")
    if block_m is None:
        block_m = _default_block_m()
    if out_dtype is None:
        out_dtype = x.dtype
    return _mat_embedding_impl(x, weight_t, bias, int(block_m),
                               jnp.dtype(out_dtype))


if __name__ == "__main__":
    # Module defaults: d_input=36, d_output=1024, dropout_p=0.0.
    d_input, d_output = 36, 1024

    key = jax.random.PRNGKey(0)
    kx, kw, kb, ke1, ke2 = jax.random.split(key, 5)

    # Deterministic nn.Linear-style init: U(-1/sqrt(d_input), 1/sqrt(d_input)).
    bound = 1.0 / jnp.sqrt(jnp.float32(d_input))
    weight = jax.random.uniform(kw, (d_output, d_input), jnp.float32,
                                minval=-bound, maxval=bound)   # PyTorch layout
    bias = jax.random.uniform(kb, (d_output,), jnp.float32,
                              minval=-bound, maxval=bound)
    # Transpose ONCE at init time (hoisted out of the per-call path).
    weight_t = jnp.asarray(weight.T)                           # [d_input, d_output]

    def ref_fn(inp):
        return inp @ weight.T + bias

    # Main case: batch=2, seq=8 -> M = 16 rows.
    x = jax.random.normal(kx, (2, 8, d_input), jnp.float32)
    y = mat_embedding(x, weight_t, bias, dropout_p=0.0)
    jax.block_until_ready(y)
    assert y.shape == (2, 8, d_output)
    assert jnp.allclose(y, ref_fn(x), atol=1e-5, rtol=1e-5)

    # Edge-block checks (per review): M not a multiple of 8, and tiny M.
    x20 = jax.random.normal(ke1, (4, 5, d_input), jnp.float32)     # M = 20
    y20 = mat_embedding(x20, weight_t, bias)
    assert y20.shape == (4, 5, d_output)
    assert jnp.allclose(y20, ref_fn(x20), atol=1e-5, rtol=1e-5)

    x4 = jax.random.normal(ke2, (1, 4, d_input), jnp.float32)      # M = 4
    y4 = mat_embedding(x4, weight_t, bias)
    assert y4.shape == (1, 4, d_output)
    assert jnp.allclose(y4, ref_fn(x4), atol=1e-5, rtol=1e-5)

    jax.block_until_ready((y, y20, y4))
    print("KERNEL_OK")
</pallas_src>

<mosaic_0001>
module attributes {stable_mosaic.version = 11 : i64} {
  func.func @_mat_embedding_kernel(%arg0: i32, %arg1: memref<16x36xf32, #tpu.memory_space<vmem>>, %arg2: memref<36x1024xf32, #tpu.memory_space<vmem>>, %arg3: memref<1x1024xf32, #tpu.memory_space<vmem>>, %arg4: memref<16x1024xf32, #tpu.memory_space<vmem>>) attributes {dimension_semantics = [#tpu.dimension_semantics<parallel>], iteration_bounds = array<i64: 1>, scalar_prefetch = 0 : i64, scratch_operands = 0 : i64, tpu.core_type = #tpu.core_type<tc>, window_params = [{transform_indices = @transform_0, window_bounds = array<i64: 16, 36>}, {pipeline_mode = #tpu.pipeline_mode<synchronous>, transform_indices = @transform_1, window_bounds = array<i64: 36, 1024>}, {pipeline_mode = #tpu.pipeline_mode<synchronous>, transform_indices = @transform_2, window_bounds = array<i64: 1, 1024>}, {transform_indices = @transform_3, window_bounds = array<i64: 16, 1024>}]} {
    %c0 = arith.constant 0 : index
    %c0_0 = arith.constant 0 : index
    %0 = vector.load %arg1[%c0, %c0_0] : memref<16x36xf32, #tpu.memory_space<vmem>>, vector<16x36xf32>
    %c0_1 = arith.constant 0 : index
    %c0_2 = arith.constant 0 : index
    %1 = vector.load %arg2[%c0_1, %c0_2] : memref<36x1024xf32, #tpu.memory_space<vmem>>, vector<36x1024xf32>
    %cst = arith.constant dense<0.000000e+00> : vector<16x1024xf32>
    %2 = tpu.matmul %0, %1, %cst {dimension_numbers = #tpu.dot_dimension_numbers<[1], [0], [0], [1], [0, 0, 1, 1], [], []>} : vector<16x36xf32>, vector<36x1024xf32>, vector<16x1024xf32> -> vector<16x1024xf32>
    %c0_3 = arith.constant 0 : index
    %c0_4 = arith.constant 0 : index
    %3 = vector.load %arg3[%c0_3, %c0_4] : memref<1x1024xf32, #tpu.memory_space<vmem>>, vector<1x1024xf32>
    %4 = vector.broadcast %3 : vector<1x1024xf32> to vector<16x1024xf32>
    %5 = arith.addf %2, %4 : vector<16x1024xf32>
    %c0_5 = arith.constant 0 : index
    %c0_6 = arith.constant 0 : index
    %6 = vector.load %arg4[%c0_5, %c0_6] : memref<16x1024xf32, #tpu.memory_space<vmem>>, vector<16x1024xf32>
    tpu.vector_store %arg4[%c0_5, %c0_6], %5 {strides = array<i32>} : memref<16x1024xf32, #tpu.memory_space<vmem>>, vector<16x1024xf32>,
    return
  }
  func.func @transform_0(%arg0: i32) -> (i32, i32) {
    %c0_i32 = arith.constant 0 : i32
    %c0_i32_0 = arith.constant 0 : i32
    return %arg0, %c0_i32 : i32, i32
  }
  func.func @transform_1(%arg0: i32) -> (i32, i32) {
    %c0_i32 = arith.constant 0 : i32
    %c0_i32_0 = arith.constant 0 : i32
    %c0_i32_1 = arith.constant 0 : i32
    return %c0_i32, %c0_i32_0 : i32, i32
  }
  func.func @transform_2(%arg0: i32) -> (i32, i32) {
    %c0_i32 = arith.constant 0 : i32
    %c0_i32_0 = arith.constant 0 : i32
    %c0_i32_1 = arith.constant 0 : i32
    return %c0_i32, %c0_i32_0 : i32, i32
  }
  func.func @transform_3(%arg0: i32) -> (i32, i32) {
    %c0_i32 = arith.constant 0 : i32
    %c0_i32_0 = arith.constant 0 : i32
    return %arg0, %c0_i32 : i32, i32
  }
}

</mosaic_0001>

<llo_original>
// kernel: _mat_embedding_impl.1
$region0: #{_mat_embedding_impl.1}
  #allocation0 [shape = 'u32[]', space=smem, size = 0x4, offset = 0x4, fixed_abs, tag = 'smem constant byte address 0x4 - core index']
  #allocation1 [shape = 'u32[144,128]{1,0:T(1,128)}', space=vmem, size = 0x12000, scoped, tag = 'internal scratch']
  %s0 = inlined_call_operand.hbm [shape: f32[16,36], index: 0, kind: input, shape index: {}]
  %s1 = inlined_call_operand.hbm [shape: f32[36,1024], index: 1, kind: input, shape index: {}]
  %s2 = inlined_call_operand.hbm [shape: f32[1,1024], index: 2, kind: input, shape index: {}]
  %s3 = inlined_call_operand.hbm [shape: f32[16,1024], index: 3, kind: output, shape index: {}]
  %s4 = sld [smem:[#allocation0]]
  $region34: #{_mat_embedding_impl.1} parent=0
    _
  %s6 = ssub.s32 1, %s4
  %s7 = scalar_select 0, %s6, %s4
  $region1: #{_mat_embedding_impl.1} parent=0
    #allocation2 [shape = 'u8[8192]{0}', space=vmem, size = 0x2000, scoped, tag = 'input window, operand 0, single buffered']
    #allocation3 [shape = 's32[1]{0}', space=sflag, size = 0x4, scoped, tag = 'scoped memory for _mat_embedding_impl.1']
    #allocation4 [shape = 's32[1]{0}', space=sflag, size = 0x4, scoped, tag = 'scoped memory for _mat_embedding_impl.1']
    #allocation5 [shape = 'u8[163840]{0}', space=vmem, size = 0x28000, scoped, tag = 'input window, operand 1, single buffered']
    #allocation6 [shape = 's32[1]{0}', space=sflag, size = 0x4, scoped, tag = 'scoped memory for _mat_embedding_impl.1']
    #allocation7 [shape = 'u8[4096]{0}', space=vmem, size = 0x1000, scoped, tag = 'input window, operand 2, single buffered']
    #allocation8 [shape = 'u8[65536]{0}', space=vmem, size = 0x10000, scoped, tag = 'output window, operand 0, single buffered']
    %8 = vsyncpa [#allocation3], 0
    %9 = vsyncpa [#allocation6], 0
    %10 = vsyncpa [#allocation4], 0
    // Predicated region
    $region2: #{_mat_embedding_impl.1} parent=1 // pred_check
      _
    $region3: #{_mat_embedding_impl.1} parent=1 // pred_check_branch
      %12 = sbr.rel (0) target = $region5
    $region4: #{_mat_embedding_impl.1} parent=1 // pred_region
      %s14 = ssub.s32 256, 256
      %15 = vsyncadd [#allocation3], %s14
      %s16 = sshll.u32 [#allocation2], 4
      %s17 = int_to_ptr.vmem [resolvable:$true] %s16
      %22 = dma.hbm_to_vmem [thread:$0]  %s0, 256, %s17, [#allocation3], 128, 128, 8
    $region5: #{_mat_embedding_impl.1} parent=1 // pred_fallthru
      _
    // Predicated region
    $region6: #{_mat_embedding_impl.1} parent=1 // pred_check
      _
    $region7: #{_mat_embedding_impl.1} parent=1 // pred_check_branch
      %24 = sbr.rel (0) target = $region9
    $region8: #{_mat_embedding_impl.1} parent=1 // pred_region
      %s26 = ssub.s32 5120, 5120
      %27 = vsyncadd [#allocation6], %s26
      %s28 = sshll.u32 [#allocation5], 4
      %s29 = int_to_ptr.vmem [resolvable:$true] %s28
      %34 = dma.hbm_to_vmem [thread:$0]  %s1, 5120, %s29, [#allocation6], 1024, 1024, 64
    $region9: #{_mat_embedding_impl.1} parent=1 // pred_fallthru
      _
    // Predicated region
    $region10: #{_mat_embedding_impl.1} parent=1 // pred_check
      _
    $region11: #{_mat_embedding_impl.1} parent=1 // pred_check_branch
      %36 = sbr.rel (0) target = $region13
    $region12: #{_mat_embedding_impl.1} parent=1 // pred_region
      %s38 = ssub.s32 128, 128
      %39 = vsyncadd [#allocation6], %s38
      %s41 = sshll.u32 [#allocation7], 4
      %s42 = int_to_ptr.vmem [resolvable:$true] %s41
      %44 = dma.hbm_to_vmem [thread:$0]  %s2, 128, %s42, [#allocation6]
    $region13: #{_mat_embedding_impl.1} parent=1 // pred_fallthru
      _
    // Predicated region
    $region14: #{_mat_embedding_impl.1} parent=1 // pred_check
      _
    $region15: #{_mat_embedding_impl.1} parent=1 // pred_check_branch
      %46 = sbr.rel (0) target = $region17
    $region16: #{_mat_embedding_impl.1} parent=1 // pred_region
      %47 = dma.done [#allocation3], 256
    $region17: #{_mat_embedding_impl.1} parent=1 // pred_fallthru
      _
    // Predicated region
    $region18: #{_mat_embedding_impl.1} parent=1 // pred_check
      _
    $region19: #{_mat_embedding_impl.1} parent=1 // pred_check_branch
      %49 = sbr.rel (0) target = $region21
    $region20: #{_mat_embedding_impl.1} parent=1 // pred_region
      %50 = dma.done [#allocation6], 5120
    $region21: #{_mat_embedding_impl.1} parent=1 // pred_fallthru
      _
    // Predicated region
    $region22: #{_mat_embedding_impl.1} parent=1 // pred_check
      _
    $region23: #{_mat_embedding_impl.1} parent=1 // pred_check_branch
      %52 = sbr.rel (0) target = $region25
    $region24: #{_mat_embedding_impl.1} parent=1 // pred_region
      %53 = dma.done [#allocation6], 128
    $region25: #{_mat_embedding_impl.1} parent=1 // pred_fallthru
      _
    %v54 = vld [vmem:[#allocation2] sm:$0xff]
    %v55 = vld [vmem:[#allocation2 + $0x8] sm:$0xff]
    %v56 = vld [vmem:[#allocation5] sm:$0xff]
    %v57 = vld [vmem:[#allocation5 + $0x8] sm:$0xff]
    %v58 = vld [vmem:[#allocation5 + $0x10] sm:$0xff]
    %v59 = vld [vmem:[#allocation5 + $0x18] sm:$0xff]
    %v60 = vld [vmem:[#allocation5 + $0x20] sm:$0xff]
    %v61 = vld [vmem:[#allocation5 + $0x28] sm:$0xff]
    %v62 = vld [vmem:[#allocation5 + $0x30] sm:$0xff]
    %v63 = vld [vmem:[#allocation5 + $0x38] sm:$0xff]
    %v64 = vld [vmem:[#allocation5 + $0x40] sm:$0xff]
    %v65 = vld [vmem:[#allocation5 + $0x48] sm:$0xff]
    %v66 = vld [vmem:[#allocation5 + $0x50] sm:$0xff]
    %v67 = vld [vmem:[#allocation5 + $0x58] sm:$0xff]
    %v68 = vld [vmem:[#allocation5 + $0x60] sm:$0xff]
    %v69 = vld [vmem:[#allocation5 + $0x68] sm:$0xff]
    %v70 = vld [vmem:[#allocation5 + $0x70] sm:$0xff]
    %v71 = vld [vmem:[#allocation5 + $0x78] sm:$0xff]
    %v72 = vld [vmem:[#allocation5 + $0x80] sm:$0xff]
    %v73 = vld [vmem:[#allocation5 + $0x88] sm:$0xff]
    %v74 = vld [vmem:[#allocation5 + $0x90] sm:$0xff]
    %v75 = vld [vmem:[#allocation5 + $0x98] sm:$0xff]
    %v76 = vld [vmem:[#allocation5 + $0xa0] sm:$0xff]
    %v77 = vld [vmem:[#allocation5 + $0xa8] sm:$0xff]
    %v78 = vld [vmem:[#allocation5 + $0xb0] sm:$0xff]
    %v79 = vld [vmem:[#allocation5 + $0xb8] sm:$0xff]
    %v80 = vld [vmem:[#allocation5 + $0xc0] sm:$0xff]
    %v81 = vld [vmem:[#allocation5 + $0xc8] sm:$0xff]
    %v82 = vld [vmem:[#allocation5 + $0xd0] sm:$0xff]
    %v83 = vld [vmem:[#allocation5 + $0xd8] sm:$0xff]
    %v84 = vld [vmem:[#allocation5 + $0xe0] sm:$0xff]
    %v85 = vld [vmem:[#allocation5 + $0xe8] sm:$0xff]
    %v86 = vld [vmem:[#allocation5 + $0xf0] sm:$0xff]
    %v87 = vld [vmem:[#allocation5 + $0xf8] sm:$0xff]
    %v88 = vld [vmem:[#allocation5 + $0x100] sm:$0xf]
    %v89 = vld [vmem:[#allocation5 + $0x108] sm:$0xf]
    %v90 = vld [vmem:[#allocation5 + $0x110] sm:$0xf]
    %v91 = vld [vmem:[#allocation5 + $0x118] sm:$0xf]
    %v92 = vld [vmem:[#allocation5 + $0x120] sm:$0xf]
    %v93 = vld [vmem:[#allocation5 + $0x128] sm:$0xf]
    %v94 = vld [vmem:[#allocation5 + $0x130] sm:$0xf]
    %v95 = vld [vmem:[#allocation5 + $0x138] sm:$0xf]
    %v96 = vld [vmem:[#allocation7] sm:$0xff]
    %v98 = vlaneseq
    %v99 = vshrl.u32 %v98, 7
    %v100 = vsub.s32 0, %v99
    %v101 = vrot.slane %v96, %v100
    %v102 = vlaneseq
    %v103 = vshrl.u32 %v102, 7
    %v104 = vsub.s32 1, %v103
    %v105 = vrot.slane %v96, %v104
    %v106 = vlaneseq
    %v107 = vshrl.u32 %v106, 7
    %v108 = vsub.s32 2, %v107
    %v109 = vrot.slane %v96, %v108
    %v110 = vlaneseq
    %v111 = vshrl.u32 %v110, 7
    %v112 = vsub.s32 3, %v111
    %v113 = vrot.slane %v96, %v112
    %v114 = vlaneseq
    %v115 = vshrl.u32 %v114, 7
    %v116 = vsub.s32 4, %v115
    %v117 = vrot.slane %v96, %v116
    %v118 = vlaneseq
    %v119 = vshrl.u32 %v118, 7
    %v120 = vsub.s32 5, %v119
    %v121 = vrot.slane %v96, %v120
    %v122 = vlaneseq
    %v123 = vshrl.u32 %v122, 7
    %v124 = vsub.s32 6, %v123
    %v125 = vrot.slane %v96, %v124
    %v126 = vlaneseq
    %v127 = vshrl.u32 %v126, 7
    %v128 = vsub.s32 7, %v127
    %v129 = vrot.slane %v96, %v128
    %vm138 = vcmask 293888
    %v140 = vsel %vm138, %v54, 0
    %v143 = vsel %vm138, %v55, 0
    %vm145 = vcmask 1043456
    %v147 = vsel %vm145, %v88, 0
    %v150 = vsel %vm145, %v89, 0
    %v153 = vsel %vm145, %v90, 0
    %v156 = vsel %vm145, %v91, 0
    %v159 = vsel %vm145, %v92, 0
    %v162 = vsel %vm145, %v93, 0
    %v165 = vsel %vm145, %v94, 0
    %v168 = vsel %vm145, %v95, 0
    %170 = vmatprep.subr.mxu0 0.0
    %171 = vmatpush1.msra.mxu0 0.0
    %172 = vmatprep.subr.mxu0 0.0
    %173 = vmatpush1.msra.mxu0 0.0
    %174 = vmatprep.subr.mxu0 0.0
    %175 = vmatpush1.msra.mxu0 0.0
    %176 = vmatprep.subr.mxu0 0.0
    %177 = vmatpush1.msra.mxu0 0.0
    %178 = vmatprep.subr.mxu0 0.0
    %179 = vmatpush1.msra.mxu0 0.0
    %180 = vmatprep.subr.mxu0 0.0
    %181 = vmatpush1.msra.mxu0 0.0
    %182 = vmatprep.subr.mxu0 0.0
    %183 = vmatpush1.msra.mxu0 0.0
    %184 = vmatprep.subr.mxu0 0.0
    %185 = vmatpush1.msra.mxu0 0.0
    %186 = vmatprep.subr.mxu0 0.0
    %187 = vmatpush1.msra.mxu0 0.0
    %188 = vmatprep.subr.mxu0 0.0
    %189 = vmatpush1.msra.mxu0 0.0
    %190 = vmatprep.subr.mxu0 0.0
    %191 = vmatpush1.msra.mxu0 0.0
    %192 = vmatprep.subr.mxu0 %v150
    %193 = vmatpush1.msra.mxu0 %v147
    %194 = vmatprep.subr.mxu0 %v81
    %195 = vmatpush1.msra.mxu0 %v80
    %196 = vmatprep.subr.mxu0 %v73
    %197 = vmatpush1.msra.mxu0 %v72
    %198 = vmatprep.subr.mxu0 %v65
    %199 = vmatpush1.msra.mxu0 %v64
    %200 = vmatprep.subr.mxu0 %v57
    %201 = vmatpush1.msra.mxu0 %v56
    %202 = vmatprep.subr.mxu0 0.0
    %203 = vmatpush2.msra.mxu0 0.0
    %204 = vmatprep.subr.mxu0 0.0
    %205 = vmatpush2.msra.mxu0 0.0
    %206 = vmatprep.subr.mxu0 0.0
    %207 = vmatpush2.msra.mxu0 0.0
    %208 = vmatprep.subr.mxu0 0.0
    %209 = vmatpush2.msra.mxu0 0.0
    %210 = vmatprep.subr.mxu0 0.0
    %211 = vmatpush2.msra.mxu0 0.0
    %212 = vmatprep.subr.mxu0 0.0
    %213 = vmatpush2.msra.mxu0 0.0
    %214 = vmatprep.subr.mxu0 0.0
    %215 = vmatpush2.msra.mxu0 0.0
    %216 = vmatprep.subr.mxu0 0.0
    %217 = vmatpush2.msra.mxu0 0.0
    %218 = vmatprep.subr.mxu0 0.0
    %219 = vmatpush2.msra.mxu0 0.0
    %220 = vmatprep.subr.mxu0 0.0
    %221 = vmatpush2.msra.mxu0 0.0
    %222 = vmatprep.subr.mxu0 0.0
    %223 = vmatpush2.msra.mxu0 0.0
    %224 = vmatprep.subr.mxu0 0.0
    %225 = vmatpush2.msra.mxu0 0.0
    %226 = vmatprep.subr.mxu0 0.0
    %227 = vmatpush2.msra.mxu0 0.0
    %228 = vmatprep.subr.mxu0 0.0
    %229 = vmatpush2.msra.mxu0 0.0
    %230 = vmatprep.subr.mxu0 0.0
    %231 = vmatpush2.msra.mxu0 0.0
    %232 = vmatprep.subr.mxu0 0.0
    %233 = vmatpush2.msra.mxu0 0.0
    %234 = vmatprep.mubr.f32.mxu0 0.0
    %235 = vmatmul.mubr.f32.gmra.mxu0 %v140
    %v236 = vpop.f32.mrf.mxu0
    %v237 = vadd.f32 %v101, %v236
    %v238 = vpop.f32.mrf.mxu0
    %v239 = vadd.f32 %v105, %v238
    %240 = vmatprep.mubr.f32.mxu0 0.0
    %241 = vmatmul.mubr.f32.gmra.mxu0 %v143
    %v242 = vpop.f32.mrf.mxu0
    %v243 = vadd.f32 %v101, %v242
    %v244 = vpop.f32.mrf.mxu0
    %v245 = vadd.f32 %v105, %v244
    %246 = vdwg.mxu0
    %247 = vmatprep.subr.mxu0 0.0
    %248 = vmatpush1.msra.mxu0 0.0
    %249 = vmatprep.subr.mxu0 0.0
    %250 = vmatpush1.msra.mxu0 0.0
    %251 = vmatprep.subr.mxu0 0.0
    %252 = vmatpush1.msra.mxu0 0.0
    %253 = vmatprep.subr.mxu0 0.0
    %254 = vmatpush1.msra.mxu0 0.0
    %255 = vmatprep.subr.mxu0 0.0
    %256 = vmatpush1.msra.mxu0 0.0
    %257 = vmatprep.subr.mxu0 0.0
    %258 = vmatpush1.msra.mxu0 0.0
    %259 = vmatprep.subr.mxu0 0.0
    %260 = vmatpush1.msra.mxu0 0.0
    %261 = vmatprep.subr.mxu0 0.0
    %262 = vmatpush1.msra.mxu0 0.0
    %263 = vmatprep.subr.mxu0 0.0
    %264 = vmatpush1.msra.mxu0 0.0
    %265 = vmatprep.subr.mxu0 0.0
    %266 = vmatpush1.msra.mxu0 0.0
    %267 = vmatprep.subr.mxu0 0.0
    %268 = vmatpush1.msra.mxu0 0.0
    %269 = vmatprep.subr.mxu0 %v156
    %270 = vmatpush1.msra.mxu0 %v153
    %271 = vmatprep.subr.mxu0 %v83
    %272 = vmatpush1.msra.mxu0 %v82
    %273 = vmatprep.subr.mxu0 %v75
    %274 = vmatpush1.msra.mxu0 %v74
    %275 = vmatprep.subr.mxu0 %v67
    %276 = vmatpush1.msra.mxu0 %v66
    %277 = vmatprep.subr.mxu0 %v59
    %278 = vmatpush1.msra.mxu0 %v58
    %279 = vmatprep.subr.mxu0 0.0
    %280 = vmatpush2.msra.mxu0 0.0
    %281 = vmatprep.subr.mxu0 0.0
    %282 = vmatpush2.msra.mxu0 0.0
    %283 = vmatprep.subr.mxu0 0.0
    %284 = vmatpush2.msra.mxu0 0.0
    %285 = vmatprep.subr.mxu0 0.0
    %286 = vmatpush2.msra.mxu0 0.0
    %287 = vmatprep.subr.mxu0 0.0
    %288 = vmatpush2.msra.mxu0 0.0
    %289 = vmatprep.subr.mxu0 0.0
    %290 = vmatpush2.msra.mxu0 0.0
    %291 = vmatprep.subr.mxu0 0.0
    %292 = vmatpush2.msra.mxu0 0.0
    %293 = vmatprep.subr.mxu0 0.0
    %294 = vmatpush2.msra.mxu0 0.0
    %295 = vmatprep.subr.mxu0 0.0
    %296 = vmatpush2.msra.mxu0 0.0
    %297 = vmatprep.subr.mxu0 0.0
    %298 = vmatpush2.msra.mxu0 0.0
    %299 = vmatprep.subr.mxu0 0.0
    %300 = vmatpush2.msra.mxu0 0.0
    %301 = vmatprep.subr.mxu0 0.0
    %302 = vmatpush2.msra.mxu0 0.0
    %303 = vmatprep.subr.mxu0 0.0
    %304 = vmatpush2.msra.mxu0 0.0
    %305 = vmatprep.subr.mxu0 0.0
    %306 = vmatpush2.msra.mxu0 0.0
    %307 = vmatprep.subr.mxu0 0.0
    %308 = vmatpush2.msra.mxu0 0.0
    %309 = vmatprep.subr.mxu0 0.0
    %310 = vmatpush2.msra.mxu0 0.0
    %311 = vmatprep.mubr.f32.mxu0 0.0
    %312 = vmatmul.mubr.f32.gmra.mxu0 %v140
    %v313 = vpop.f32.mrf.mxu0
    %v314 = vadd.f32 %v109, %v313
    %v315 = vpop.f32.mrf.mxu0
    %v316 = vadd.f32 %v113, %v315
    %317 = vmatprep.mubr.f32.mxu0 0.0
    %318 = vmatmul.mubr.f32.gmra.mxu0 %v143
    %v319 = vpop.f32.mrf.mxu0
    %v320 = vadd.f32 %v109, %v319
    %v321 = vpop.f32.mrf.mxu0
    %v322 = vadd.f32 %v113, %v321
    %323 = vdwg.mxu0
    %324 = vmatprep.subr.mxu0 0.0
    %325 = vmatpush1.msra.mxu0 0.0
    %326 = vmatprep.subr.mxu0 0.0
    %327 = vmatpush1.msra.mxu0 0.0
    %328 = vmatprep.subr.mxu0 0.0
    %329 = vmatpush1.msra.mxu0 0.0
    %330 = vmatprep.subr.mxu0 0.0
    %331 = vmatpush1.msra.mxu0 0.0
    %332 = vmatprep.subr.mxu0 0.0
    %333 = vmatpush1.msra.mxu0 0.0
    %334 = vmatprep.subr.mxu0 0.0
    %335 = vmatpush1.msra.mxu0 0.0
    %336 = vmatprep.subr.mxu0 0.0
    %337 = vmatpush1.msra.mxu0 0.0
    %338 = vmatprep.subr.mxu0 0.0
    %339 = vmatpush1.msra.mxu0 0.0
    %340 = vmatprep.subr.mxu0 0.0
    %341 = vmatpush1.msra.mxu0 0.0
    %342 = vmatprep.subr.mxu0 0.0
    %343 = vmatpush1.msra.mxu0 0.0
    %344 = vmatprep.subr.mxu0 0.0
    %345 = vmatpush1.msra.mxu0 0.0
    %346 = vmatprep.subr.mxu0 %v162
    %347 = vmatpush1.msra.mxu0 %v159
    %348 = vmatprep.subr.mxu0 %v85
    %349 = vmatpush1.msra.mxu0 %v84
    %350 = vmatprep.subr.mxu0 %v77
    %351 = vmatpush1.msra.mxu0 %v76
    %352 = vmatprep.subr.mxu0 %v69
    %353 = vmatpush1.msra.mxu0 %v68
    %354 = vmatprep.subr.mxu0 %v61
    %355 = vmatpush1.msra.mxu0 %v60
    %356 = vmatprep.subr.mxu0 0.0
    %357 = vmatpush2.msra.mxu0 0.0
    %358 = vmatprep.subr.mxu0 0.0
    %359 = vmatpush2.msra.mxu0 0.0
    %360 = vmatprep.subr.mxu0 0.0
    %361 = vmatpush2.msra.mxu0 0.0
    %362 = vmatprep.subr.mxu0 0.0
    %363 = vmatpush2.msra.mxu0 0.0
    %364 = vmatprep.subr.mxu0 0.0
    %365 = vmatpush2.msra.mxu0 0.0
    %366 = vmatprep.subr.mxu0 0.0
    %367 = vmatpush2.msra.mxu0 0.0
    %368 = vmatprep.subr.mxu0 0.0
    %369 = vmatpush2.msra.mxu0 0.0
    %370 = vmatprep.subr.mxu0 0.0
    %371 = vmatpush2.msra.mxu0 0.0
    %372 = vmatprep.subr.mxu0 0.0
    %373 = vmatpush2.msra.mxu0 0.0
    %374 = vmatprep.subr.mxu0 0.0
    %375 = vmatpush2.msra.mxu0 0.0
    %376 = vmatprep.subr.mxu0 0.0
    %377 = vmatpush2.msra.mxu0 0.0
    %378 = vmatprep.subr.mxu0 0.0
    %379 = vmatpush2.msra.mxu0 0.0
    %380 = vmatprep.subr.mxu0 0.0
    %381 = vmatpush2.msra.mxu0 0.0
    %382 = vmatprep.subr.mxu0 0.0
    %383 = vmatpush2.msra.mxu0 0.0
    %384 = vmatprep.subr.mxu0 0.0
    %385 = vmatpush2.msra.mxu0 0.0
    %386 = vmatprep.subr.mxu0 0.0
    %387 = vmatpush2.msra.mxu0 0.0
    %388 = vmatprep.mubr.f32.mxu0 0.0
    %389 = vmatmul.mubr.f32.gmra.mxu0 %v140
    %v390 = vpop.f32.mrf.mxu0
    %v391 = vadd.f32 %v117, %v390
    %v392 = vpop.f32.mrf.mxu0
    %v393 = vadd.f32 %v121, %v392
    %394 = vmatprep.mubr.f32.mxu0 0.0
    %395 = vmatmul.mubr.f32.gmra.mxu0 %v143
    %v396 = vpop.f32.mrf.mxu0
    %v397 = vadd.f32 %v117, %v396
    %v398 = vpop.f32.mrf.mxu0
    %v399 = vadd.f32 %v121, %v398
    %400 = vdwg.mxu0
    %401 = vmatprep.subr.mxu0 0.0
    %402 = vmatpush1.msra.mxu0 0.0
    %403 = vmatprep.subr.mxu0 0.0
    %404 = vmatpush1.msra.mxu0 0.0
    %405 = vmatprep.subr.mxu0 0.0
    %406 = vmatpush1.msra.mxu0 0.0
    %407 = vmatprep.subr.mxu0 0.0
    %408 = vmatpush1.msra.mxu0 0.0
    %409 = vmatprep.subr.mxu0 0.0
    %410 = vmatpush1.msra.mxu0 0.0
    %411 = vmatprep.subr.mxu0 0.0
    %412 = vmatpush1.msra.mxu0 0.0
    %413 = vmatprep.subr.mxu0 0.0
    %414 = vmatpush1.msra.mxu0 0.0
    %415 = vmatprep.subr.mxu0 0.0
    %416 = vmatpush1.msra.mxu0 0.0
    %417 = vmatprep.subr.mxu0 0.0
    %418 = vmatpush1.msra.mxu0 0.0
    %419 = vmatprep.subr.mxu0 0.0
    %420 = vmatpush1.msra.mxu0 0.0
    %421 = vmatprep.subr.mxu0 0.0
    %422 = vmatpush1.msra.mxu0 0.0
    %423 = vmatprep.subr.mxu0 %v168
    %424 = vmatpush1.msra.mxu0 %v165
    %425 = vmatprep.subr.mxu0 %v87
    %426 = vmatpush1.msra.mxu0 %v86
    %427 = vmatprep.subr.mxu0 %v79
    %428 = vmatpush1.msra.mxu0 %v78
    %429 = vmatprep.subr.mxu0 %v71
    %430 = vmatpush1.msra.mxu0 %v70
    %431 = vmatprep.subr.mxu0 %v63
    %432 = vmatpush1.msra.mxu0 %v62
    %433 = vmatprep.subr.mxu0 0.0
    %434 = vmatpush2.msra.mxu0 0.0
    %435 = vmatprep.subr.mxu0 0.0
    %436 = vmatpush2.msra.mxu0 0.0
    %437 = vmatprep.subr.mxu0 0.0
    %438 = vmatpush2.msra.mxu0 0.0
    %439 = vmatprep.subr.mxu0 0.0
    %440 = vmatpush2.msra.mxu0 0.0
    %441 = vmatprep.subr.mxu0 0.0
    %442 = vmatpush2.msra.mxu0 0.0
    %443 = vmatprep.subr.mxu0 0.0
    %444 = vmatpush2.msra.mxu0 0.0
    %445 = vmatprep.subr.mxu0 0.0
    %446 = vmatpush2.msra.mxu0 0.0
    %447 = vmatprep.subr.mxu0 0.0
    %448 = vmatpush2.msra.mxu0 0.0
    %449 = vmatprep.subr.mxu0 0.0
    %450 = vmatpush2.msra.mxu0 0.0
    %451 = vmatprep.subr.mxu0 0.0
    %452 = vmatpush2.msra.mxu0 0.0
    %453 = vmatprep.subr.mxu0 0.0
    %454 = vmatpush2.msra.mxu0 0.0
    %455 = vmatprep.subr.mxu0 0.0
    %456 = vmatpush2.msra.mxu0 0.0
    %457 = vmatprep.subr.mxu0 0.0
    %458 = vmatpush2.msra.mxu0 0.0
    %459 = vmatprep.subr.mxu0 0.0
    %460 = vmatpush2.msra.mxu0 0.0
    %461 = vmatprep.subr.mxu0 0.0
    %462 = vmatpush2.msra.mxu0 0.0
    %463 = vmatprep.subr.mxu0 0.0
    %464 = vmatpush2.msra.mxu0 0.0
    %465 = vmatprep.mubr.f32.mxu0 0.0
    %466 = vmatmul.mubr.f32.gmra.mxu0 %v140
    %v467 = vpop.f32.mrf.mxu0
    %v468 = vadd.f32 %v125, %v467
    %v469 = vpop.f32.mrf.mxu0
    %v470 = vadd.f32 %v129, %v469
    %471 = vmatprep.mubr.f32.mxu0 0.0
    %472 = vmatmul.mubr.f32.gmra.mxu0 %v143
    %v473 = vpop.f32.mrf.mxu0
    %v474 = vadd.f32 %v125, %v473
    %v475 = vpop.f32.mrf.mxu0
    %v476 = vadd.f32 %v129, %v475
    %477 = vdwg.mxu0
    %478 = vst [vmem:[#allocation8] sm:$0xff] %v237
    %479 = vst [vmem:[#allocation8 + $0x8] sm:$0xff] %v239
    %480 = vst [vmem:[#allocation8 + $0x10] sm:$0xff] %v314
    %481 = vst [vmem:[#allocation8 + $0x18] sm:$0xff] %v316
    %482 = vst [vmem:[#allocation8 + $0x20] sm:$0xff] %v391
    %483 = vst [vmem:[#allocation8 + $0x28] sm:$0xff] %v393
    %484 = vst [vmem:[#allocation8 + $0x30] sm:$0xff] %v468
    %485 = vst [vmem:[#allocation8 + $0x38] sm:$0xff] %v470
    %486 = vst [vmem:[#allocation8 + $0x40] sm:$0xff] %v243
    %487 = vst [vmem:[#allocation8 + $0x48] sm:$0xff] %v245
    %488 = vst [vmem:[#allocation8 + $0x50] sm:$0xff] %v320
    %489 = vst [vmem:[#allocation8 + $0x58] sm:$0xff] %v322
    %490 = vst [vmem:[#allocation8 + $0x60] sm:$0xff] %v397
    %491 = vst [vmem:[#allocation8 + $0x68] sm:$0xff] %v399
    %492 = vst [vmem:[#allocation8 + $0x70] sm:$0xff] %v474
    %493 = vst [vmem:[#allocation8 + $0x78] sm:$0xff] %v476
    // Predicated region
    $region26: #{_mat_embedding_impl.1} parent=1 // pred_check
      _
    $region27: #{_mat_embedding_impl.1} parent=1 // pred_check_branch
      %495 = sbr.rel (0) target = $region29
    $region28: #{_mat_embedding_impl.1} parent=1 // pred_region
      %s497 = ssub.s32 2048, 2048
      %498 = vsyncadd [#allocation4], %s497
      %s499 = sshll.u32 [#allocation8], 4
      %s500 = int_to_ptr.vmem [resolvable:$true] %s499
      %505 = dma.vmem_to_hbm [thread:$0]  %s500, 2048, %s3, [#allocation4], 1024, 1024, 64
    $region29: #{_mat_embedding_impl.1} parent=1 // pred_fallthru
      _
    // Predicated region
    $region30: #{_mat_embedding_impl.1} parent=1 // pred_check
      _
    $region31: #{_mat_embedding_impl.1} parent=1 // pred_check_branch
      %507 = sbr.rel (0) target = $region33
    $region32: #{_mat_embedding_impl.1} parent=1 // pred_region
      %508 = dma.done [#allocation4], 2048
    $region33: #{_mat_embedding_impl.1} parent=1 // pred_fallthru
      _
    %509 = vsyncpa [#allocation3], 1
    %510 = vsyncpa [#allocation6], 1
    %511 = vsyncpa [#allocation4], 1

</llo_original>
